<compile_context>
chip_gen: v5e
topology: v5e:2x2
jax: 0.10.0
libtpu: 0.0.40
codegen_flags: <defaults>
</compile_context>

<pallas_src>
import math

import jax
import jax.numpy as jnp
from jax.experimental import pallas as pl
from jax.experimental.pallas import tpu as pltpu


# ---------------------------------------------------------------------------
# Kernels
# ---------------------------------------------------------------------------

def transform_kernel(x_ref, w_ref, o_ref):
    """o_tile = x_tile @ w1   (layer-1 feature transform, pre-aggregation)."""
    o_ref[...] = jnp.dot(
        x_ref[...], w_ref[...], preferred_element_type=jnp.float32
    ).astype(o_ref.dtype)


def agg_relu_transform_kernel(adj_ref, t1_ref, b1_ref, w2_ref, o_ref, acc_ref):
    """K-tiled: acc += adj_tile @ t1_kslab; at k==last: o = relu(acc+b1) @ w2.

    Fuses layer-1 aggregation + bias + ReLU with the (reassociated) layer-2
    feature transform; the hidden activation lives only in the f32 VMEM
    accumulator.  Dropout(p=0.8) is identity in eval mode.
    """
    k = pl.program_id(1)

    @pl.when(k == 0)
    def _():
        acc_ref[...] = jnp.zeros_like(acc_ref)

    acc_ref[...] += jnp.dot(
        adj_ref[...], t1_ref[...], preferred_element_type=jnp.float32
    )

    @pl.when(k == pl.num_programs(1) - 1)
    def _():
        h = jnp.maximum(acc_ref[...] + b1_ref[...], 0.0)
        # TODO(synk): training-mode dropout would use pltpu.prng_seed +
        # pltpu.stateful_bernoulli here; eval mode is identity.
        o_ref[...] = jnp.dot(
            h.astype(w2_ref.dtype), w2_ref[...],
            preferred_element_type=jnp.float32,
        ).astype(o_ref.dtype)


def agg_bias_kernel(adj_ref, t2_ref, b2_ref, o_ref, acc_ref):
    """K-tiled: acc += adj_tile @ t2_kslab; at k==last: o = acc + b2 (f32)."""
    k = pl.program_id(1)

    @pl.when(k == 0)
    def _():
        acc_ref[...] = jnp.zeros_like(acc_ref)

    acc_ref[...] += jnp.dot(
        adj_ref[...], t2_ref[...], preferred_element_type=jnp.float32
    )

    @pl.when(k == pl.num_programs(1) - 1)
    def _():
        o_ref[...] = acc_ref[...] + b2_ref[...]


def fused_gcn_kernel(adj_ref, x_ref, w1_ref, b1_ref, w2_ref, b2_ref, o_ref):
    """Small-graph fast path: the entire 2-layer GCN forward in one kernel.

    out = adj @ relu(adj @ (x @ w1) + b1) @ w2 + b2, all intermediates in VMEM.
    """
    dt = adj_ref.dtype
    t1 = jnp.dot(x_ref[...], w1_ref[...], preferred_element_type=jnp.float32)
    h = jnp.dot(adj_ref[...], t1.astype(dt), preferred_element_type=jnp.float32)
    h = jnp.maximum(h + b1_ref[...], 0.0)
    t2 = jnp.dot(h.astype(dt), w2_ref[...], preferred_element_type=jnp.float32)
    o_ref[...] = (
        jnp.dot(adj_ref[...], t2.astype(dt), preferred_element_type=jnp.float32)
        + b2_ref[...]
    )


# ---------------------------------------------------------------------------
# Wrapper
# ---------------------------------------------------------------------------

def _round_up(v, m):
    return (v + m - 1) // m * m


def _pad_to(a, shape):
    return jnp.pad(a, [(0, s - d) for d, s in zip(a.shape, shape)])


def prepare_gcn_inputs(adj, x, w1, b1, w2, b2, *, tm=256, tk=512,
                       compute_dtype=jnp.bfloat16):
    """Pad + cast once (hoisted out of the per-call forward).

    Padded rows/cols are zero so they are inert through both layers (zero adj
    columns kill padded node rows; zero weight columns kill padded channels).
    Weights come pre-transposed as (in, out).
    """
    n, f_in = x.shape
    hidden = w1.shape[1]
    n_cls = w2.shape[1]
    assert adj.shape == (n, n)
    assert w1.shape == (f_in, hidden) and b1.shape == (1, hidden)
    assert w2.shape == (hidden, n_cls) and b2.shape == (1, n_cls)

    n128 = _round_up(n, 128)
    tm = min(_round_up(tm, 128), n128)
    tk = min(_round_up(tk, 128), n128)
    lcm = tm * tk // math.gcd(tm, tk)
    n_pad = _round_up(n, lcm)          # node dim divisible by both tm and tk
    f_pad = _round_up(f_in, 128)
    h_pad = _round_up(hidden, 128)
    c_pad = _round_up(n_cls, 128)

    return dict(
        adj=_pad_to(adj, (n_pad, n_pad)).astype(compute_dtype),
        x=_pad_to(x, (n_pad, f_pad)).astype(compute_dtype),
        w1=_pad_to(w1, (f_pad, h_pad)).astype(compute_dtype),
        b1=_pad_to(b1, (1, h_pad)).astype(jnp.float32),
        w2=_pad_to(w2, (h_pad, c_pad)).astype(compute_dtype),
        b2=_pad_to(b2, (1, c_pad)).astype(jnp.float32),
        n=n, n_cls=n_cls, tm=tm, tk=tk,
    )


def _fused_vmem_bytes(prep):
    n_pad, f_pad = prep["x"].shape
    h_pad = prep["w1"].shape[1]
    c_pad = prep["w2"].shape[1]
    itemsize = jnp.dtype(prep["adj"].dtype).itemsize
    ins = (n_pad * n_pad + n_pad * f_pad + f_pad * h_pad + h_pad * c_pad) * itemsize
    tmps = (2 * n_pad * h_pad + 2 * n_pad * c_pad) * 4     # f32 intermediates
    return ins + tmps


def gcn_forward_fused(adj_p, x_p, w1_p, b1_p, w2_p, b2_p):
    n_pad = adj_p.shape[0]
    f_pad = x_p.shape[1]
    h_pad = w1_p.shape[1]
    c_pad = w2_p.shape[1]
    full = lambda bs: pl.BlockSpec(bs, lambda i: (0, 0))
    return pl.pallas_call(
        fused_gcn_kernel,
        out_shape=jax.ShapeDtypeStruct((n_pad, c_pad), jnp.float32),
        grid=(1,),
        in_specs=[full((n_pad, n_pad)), full((n_pad, f_pad)),
                  full((f_pad, h_pad)), full((1, h_pad)),
                  full((h_pad, c_pad)), full((1, c_pad))],
        out_specs=full((n_pad, c_pad)),
    )(adj_p, x_p, w1_p, b1_p, w2_p, b2_p)


def gcn_forward_tiled(adj_p, x_p, w1_p, b1_p, w2_p, b2_p, *, tm, tk):
    n_pad = adj_p.shape[0]
    f_pad = x_p.shape[1]
    h_pad = w1_p.shape[1]
    c_pad = w2_p.shape[1]
    cdt = adj_p.dtype
    assert n_pad % tm == 0 and n_pad % tk == 0

    row_grid = (n_pad // tm,)
    row = lambda bs: pl.BlockSpec(bs, lambda i: (i, 0))     # row-tiled
    rfull = lambda bs: pl.BlockSpec(bs, lambda i: (0, 0))   # VMEM-resident
    params_row = pltpu.CompilerParams(dimension_semantics=("parallel",))

    # Stage 1: t1 = x @ w1                                   (n_pad, h_pad)
    t1 = pl.pallas_call(
        transform_kernel,
        out_shape=jax.ShapeDtypeStruct((n_pad, h_pad), cdt),
        grid=row_grid,
        in_specs=[row((tm, f_pad)), rfull((f_pad, h_pad))],
        out_specs=row((tm, h_pad)),
        compiler_params=params_row,
    )(x_p, w1_p)

    grid2 = (n_pad // tm, n_pad // tk)
    params2 = pltpu.CompilerParams(
        dimension_semantics=("parallel", "arbitrary"))

    # Stage 2: t2 = relu(adj @ t1 + b1) @ w2                 (n_pad, c_pad)
    t2 = pl.pallas_call(
        agg_relu_transform_kernel,
        out_shape=jax.ShapeDtypeStruct((n_pad, c_pad), cdt),
        grid=grid2,
        in_specs=[pl.BlockSpec((tm, tk), lambda i, k: (i, k)),
                  pl.BlockSpec((tk, h_pad), lambda i, k: (k, 0)),
                  pl.BlockSpec((1, h_pad), lambda i, k: (0, 0)),
                  pl.BlockSpec((h_pad, c_pad), lambda i, k: (0, 0))],
        out_specs=pl.BlockSpec((tm, c_pad), lambda i, k: (i, 0)),
        scratch_shapes=[pltpu.VMEM((tm, h_pad), jnp.float32)],
        compiler_params=params2,
    )(adj_p, t1, b1_p, w2_p)

    # Stage 3: out = adj @ t2 + b2                           (n_pad, c_pad) f32
    out = pl.pallas_call(
        agg_bias_kernel,
        out_shape=jax.ShapeDtypeStruct((n_pad, c_pad), jnp.float32),
        grid=grid2,
        in_specs=[pl.BlockSpec((tm, tk), lambda i, k: (i, k)),
                  pl.BlockSpec((tk, c_pad), lambda i, k: (k, 0)),
                  pl.BlockSpec((1, c_pad), lambda i, k: (0, 0))],
        out_specs=pl.BlockSpec((tm, c_pad), lambda i, k: (i, 0)),
        scratch_shapes=[pltpu.VMEM((tm, c_pad), jnp.float32)],
        compiler_params=params2,
    )(adj_p, t2, b2_p)

    return out


def gcn_forward_padded(prep, *, force_tiled=False, fused_vmem_budget=12 << 20):
    """Run the forward on pre-padded/cast inputs; returns (n, n_cls) f32 logits."""
    if (not force_tiled) and _fused_vmem_bytes(prep) <= fused_vmem_budget:
        out = gcn_forward_fused(prep["adj"], prep["x"], prep["w1"],
                                prep["b1"], prep["w2"], prep["b2"])
    else:
        out = gcn_forward_tiled(prep["adj"], prep["x"], prep["w1"],
                                prep["b1"], prep["w2"], prep["b2"],
                                tm=prep["tm"], tk=prep["tk"])
    return out[:prep["n"], :prep["n_cls"]]


def gcn_forward(adj, x, w1, b1, w2, b2, *, tm=256, tk=512,
                compute_dtype=jnp.bfloat16, force_tiled=False):
    """Convenience: pad/cast (once) + forward. Weights pre-transposed (in, out)."""
    prep = prepare_gcn_inputs(adj, x, w1, b1, w2, b2, tm=tm, tk=tk,
                              compute_dtype=compute_dtype)
    return gcn_forward_padded(prep, force_tiled=force_tiled)


# ---------------- glue: deterministic synthetic data / params -----------------

def xavier_uniform(key, fan_in, fan_out):
    # matches nn.init.xavier_uniform_ on a (fan_out, fan_in) weight;
    # returned already transposed to (fan_in, fan_out).
    limit = jnp.sqrt(6.0 / (fan_in + fan_out))
    w = jax.random.uniform(key, (fan_out, fan_in), jnp.float32, -limit, limit)
    return w.T


def normalize_adj_dense(adj):
    """D^{-1/2} A D^{-1/2} (dense equivalent of normalize_adj)."""
    row_sum = adj.sum(axis=1)
    d_inv_sqrt = jnp.where(row_sum > 0, row_sum ** -0.5, 0.0)
    return adj * d_inv_sqrt[:, None] * d_inv_sqrt[None, :]


def l2_normalize_rows(x, eps=1e-12):
    """F.normalize(X, p=2, dim=1)."""
    norm = jnp.sqrt(jnp.sum(x * x, axis=1, keepdims=True))
    return x / jnp.maximum(norm, eps)


if __name__ == "__main__":
    key = jax.random.PRNGKey(0)
    k_adj, k_x, k_w1, k_w2 = jax.random.split(key, 4)

    # Small Cora-like problem: N nodes, F input features, hidden_dim=32, 7 classes.
    N, F_IN, HIDDEN, N_CLS = 200, 100, 32, 7

    # Synthetic sparse-ish symmetric adjacency with self loops, then normalized.
    a = (jax.random.uniform(k_adj, (N, N)) < 0.05).astype(jnp.float32)
    a = jnp.maximum(a, a.T)
    a = jnp.maximum(a, jnp.eye(N, dtype=jnp.float32))
    adj_norm = normalize_adj_dense(a)

    # Node features, row-L2-normalized like train_model does.
    x = jax.random.uniform(k_x, (N, F_IN), jnp.float32)
    x_norm = l2_normalize_rows(x)

    # gc1 / gc2 linear parameters, deterministic init.
    w1 = xavier_uniform(k_w1, F_IN, HIDDEN)     # (F_IN, HIDDEN)
    b1 = jnp.zeros((1, HIDDEN), jnp.float32)
    w2 = xavier_uniform(k_w2, HIDDEN, N_CLS)    # (HIDDEN, N_CLS)
    b2 = jnp.zeros((1, N_CLS), jnp.float32)

    # f32 reference of the same forward pass (dropout is identity in eval mode).
    h_ref = jnp.maximum(adj_norm @ x_norm @ w1 + b1, 0.0)
    ref = adj_norm @ h_ref @ w2 + b2

    # --- default path: pad/cast hoisted, fused single-kernel small-graph path ---
    prep = prepare_gcn_inputs(adj_norm, x_norm, w1, b1, w2, b2)
    logits = gcn_forward_padded(prep)
    jax.block_until_ready(logits)
    assert logits.shape == (N, N_CLS)
    err_fused = float(jnp.max(jnp.abs(logits - ref)))
    assert jnp.allclose(logits, ref, atol=2e-2, rtol=2e-2), err_fused

    # --- k-tiled large-graph path, exercised at small tiles for correctness ---
    logits_tiled = gcn_forward(adj_norm, x_norm, w1, b1, w2, b2,
                               tm=128, tk=128, force_tiled=True)
    jax.block_until_ready(logits_tiled)
    assert logits_tiled.shape == (N, N_CLS)
    err_tiled = float(jnp.max(jnp.abs(logits_tiled - ref)))
    assert jnp.allclose(logits_tiled, ref, atol=2e-2, rtol=2e-2), err_tiled

    print("KERNEL_OK")
</pallas_src>

<mosaic_0001>
module attributes {stable_mosaic.version = 11 : i64} {
  func.func @fused_gcn_kernel(%arg0: i32, %arg1: memref<256x256xbf16, #tpu.memory_space<vmem>>, %arg2: memref<256x128xbf16, #tpu.memory_space<vmem>>, %arg3: memref<128x128xbf16, #tpu.memory_space<vmem>>, %arg4: memref<1x128xf32, #tpu.memory_space<vmem>>, %arg5: memref<128x128xbf16, #tpu.memory_space<vmem>>, %arg6: memref<1x128xf32, #tpu.memory_space<vmem>>, %arg7: memref<256x128xf32, #tpu.memory_space<vmem>>) attributes {dimension_semantics = [#tpu.dimension_semantics<arbitrary>], iteration_bounds = array<i64: 1>, scalar_prefetch = 0 : i64, scratch_operands = 0 : i64, tpu.core_type = #tpu.core_type<tc>, window_params = [{pipeline_mode = #tpu.pipeline_mode<synchronous>, transform_indices = @transform_0, window_bounds = array<i64: 256, 256>}, {pipeline_mode = #tpu.pipeline_mode<synchronous>, transform_indices = @transform_1, window_bounds = array<i64: 256, 128>}, {pipeline_mode = #tpu.pipeline_mode<synchronous>, transform_indices = @transform_2, window_bounds = array<i64: 128, 128>}, {pipeline_mode = #tpu.pipeline_mode<synchronous>, transform_indices = @transform_3, window_bounds = array<i64: 1, 128>}, {pipeline_mode = #tpu.pipeline_mode<synchronous>, transform_indices = @transform_4, window_bounds = array<i64: 128, 128>}, {pipeline_mode = #tpu.pipeline_mode<synchronous>, transform_indices = @transform_5, window_bounds = array<i64: 1, 128>}, {pipeline_mode = #tpu.pipeline_mode<synchronous>, transform_indices = @transform_6, window_bounds = array<i64: 256, 128>}]} {
    %c0 = arith.constant 0 : index
    %c0_0 = arith.constant 0 : index
    %0 = vector.load %arg2[%c0, %c0_0] : memref<256x128xbf16, #tpu.memory_space<vmem>>, vector<256x128xbf16>
    %c0_1 = arith.constant 0 : index
    %c0_2 = arith.constant 0 : index
    %1 = vector.load %arg3[%c0_1, %c0_2] : memref<128x128xbf16, #tpu.memory_space<vmem>>, vector<128x128xbf16>
    %cst = arith.constant dense<0.000000e+00> : vector<256x128xf32>
    %2 = tpu.matmul %0, %1, %cst {dimension_numbers = #tpu.dot_dimension_numbers<[1], [0], [0], [1], [0, 0, 1, 1], [], []>} : vector<256x128xbf16>, vector<128x128xbf16>, vector<256x128xf32> -> vector<256x128xf32>
    %c0_3 = arith.constant 0 : index
    %c0_4 = arith.constant 0 : index
    %3 = vector.load %arg1[%c0_3, %c0_4] : memref<256x256xbf16, #tpu.memory_space<vmem>>, vector<256x256xbf16>
    %4 = arith.truncf %2 : vector<256x128xf32> to vector<256x128xbf16>
    %cst_5 = arith.constant dense<0.000000e+00> : vector<256x128xf32>
    %5 = tpu.matmul %3, %4, %cst_5 {dimension_numbers = #tpu.dot_dimension_numbers<[1], [0], [0], [1], [0, 0, 1, 1], [], []>} : vector<256x256xbf16>, vector<256x128xbf16>, vector<256x128xf32> -> vector<256x128xf32>
    %c0_6 = arith.constant 0 : index
    %c0_7 = arith.constant 0 : index
    %6 = vector.load %arg4[%c0_6, %c0_7] : memref<1x128xf32, #tpu.memory_space<vmem>>, vector<1x128xf32>
    %7 = vector.broadcast %6 : vector<1x128xf32> to vector<256x128xf32>
    %8 = arith.addf %5, %7 : vector<256x128xf32>
    %cst_8 = arith.constant 0.000000e+00 : f32
    %9 = vector.broadcast %cst_8 : f32 to vector<256x128xf32>
    %10 = arith.maximumf %8, %9 : vector<256x128xf32>
    %11 = arith.truncf %10 : vector<256x128xf32> to vector<256x128xbf16>
    %c0_9 = arith.constant 0 : index
    %c0_10 = arith.constant 0 : index
    %12 = vector.load %arg5[%c0_9, %c0_10] : memref<128x128xbf16, #tpu.memory_space<vmem>>, vector<128x128xbf16>
    %cst_11 = arith.constant dense<0.000000e+00> : vector<256x128xf32>
    %13 = tpu.matmul %11, %12, %cst_11 {dimension_numbers = #tpu.dot_dimension_numbers<[1], [0], [0], [1], [0, 0, 1, 1], [], []>} : vector<256x128xbf16>, vector<128x128xbf16>, vector<256x128xf32> -> vector<256x128xf32>
    %c0_12 = arith.constant 0 : index
    %c0_13 = arith.constant 0 : index
    %14 = vector.load %arg1[%c0_12, %c0_13] : memref<256x256xbf16, #tpu.memory_space<vmem>>, vector<256x256xbf16>
    %15 = arith.truncf %13 : vector<256x128xf32> to vector<256x128xbf16>
    %cst_14 = arith.constant dense<0.000000e+00> : vector<256x128xf32>
    %16 = tpu.matmul %14, %15, %cst_14 {dimension_numbers = #tpu.dot_dimension_numbers<[1], [0], [0], [1], [0, 0, 1, 1], [], []>} : vector<256x256xbf16>, vector<256x128xbf16>, vector<256x128xf32> -> vector<256x128xf32>
    %c0_15 = arith.constant 0 : index
    %c0_16 = arith.constant 0 : index
    %17 = vector.load %arg6[%c0_15, %c0_16] : memref<1x128xf32, #tpu.memory_space<vmem>>, vector<1x128xf32>
    %18 = vector.broadcast %17 : vector<1x128xf32> to vector<256x128xf32>
    %19 = arith.addf %16, %18 : vector<256x128xf32>
    %c0_17 = arith.constant 0 : index
    %c0_18 = arith.constant 0 : index
    %20 = vector.load %arg7[%c0_17, %c0_18] : memref<256x128xf32, #tpu.memory_space<vmem>>, vector<256x128xf32>
    tpu.vector_store %arg7[%c0_17, %c0_18], %19 {strides = array<i32>} : memref<256x128xf32, #tpu.memory_space<vmem>>, vector<256x128xf32>,
    return
  }
  func.func @transform_0(%arg0: i32) -> (i32, i32) {
    %c0_i32 = arith.constant 0 : i32
    %c0_i32_0 = arith.constant 0 : i32
    %c0_i32_1 = arith.constant 0 : i32
    return %c0_i32, %c0_i32_0 : i32, i32
  }
  func.func @transform_1(%arg0: i32) -> (i32, i32) {
    %c0_i32 = arith.constant 0 : i32
    %c0_i32_0 = arith.constant 0 : i32
    %c0_i32_1 = arith.constant 0 : i32
    return %c0_i32, %c0_i32_0 : i32, i32
  }
  func.func @transform_2(%arg0: i32) -> (i32, i32) {
    %c0_i32 = arith.constant 0 : i32
    %c0_i32_0 = arith.constant 0 : i32
    %c0_i32_1 = arith.constant 0 : i32
    return %c0_i32, %c0_i32_0 : i32, i32
  }
  func.func @transform_3(%arg0: i32) -> (i32, i32) {
    %c0_i32 = arith.constant 0 : i32
    %c0_i32_0 = arith.constant 0 : i32
    %c0_i32_1 = arith.constant 0 : i32
    return %c0_i32, %c0_i32_0 : i32, i32
  }
  func.func @transform_4(%arg0: i32) -> (i32, i32) {
    %c0_i32 = arith.constant 0 : i32
    %c0_i32_0 = arith.constant 0 : i32
    %c0_i32_1 = arith.constant 0 : i32
    return %c0_i32, %c0_i32_0 : i32, i32
  }
  func.func @transform_5(%arg0: i32) -> (i32, i32) {
    %c0_i32 = arith.constant 0 : i32
    %c0_i32_0 = arith.constant 0 : i32
    %c0_i32_1 = arith.constant 0 : i32
    return %c0_i32, %c0_i32_0 : i32, i32
  }
  func.func @transform_6(%arg0: i32) -> (i32, i32) {
    %c0_i32 = arith.constant 0 : i32
    %c0_i32_0 = arith.constant 0 : i32
    %c0_i32_1 = arith.constant 0 : i32
    return %c0_i32, %c0_i32_0 : i32, i32
  }
}

</mosaic_0001>

<llo_original>
// kernel: tpu_custom_call.1
$region0: #{tpu_custom_call.1}
  #allocation0 [shape = 'u32[]', space=smem, size = 0x4, offset = 0x4, fixed_abs, tag = 'smem constant byte address 0x4 - core index']
  #allocation1 [shape = 'u32[72,128]{1,0:T(1,128)}', space=vmem, size = 0x9000, scoped, tag = 'internal scratch']
  %s0 = inlined_call_operand.hbm [shape: bf16[256,256], index: 0, kind: input, shape index: {}]
  %s1 = inlined_call_operand.hbm [shape: bf16[256,128], index: 1, kind: input, shape index: {}]
  %s2 = inlined_call_operand.hbm [shape: bf16[128,128], index: 2, kind: input, shape index: {}]
  %s3 = inlined_call_operand.vmem [shape: f32[1,128], index: 3, kind: input, shape index: {}]
  %s4 = inlined_call_operand.hbm [shape: bf16[128,128], index: 4, kind: input, shape index: {}]
  %s5 = inlined_call_operand.vmem [shape: f32[1,128], index: 5, kind: input, shape index: {}]
  %s6 = inlined_call_operand.hbm [shape: f32[256,128], index: 6, kind: output, shape index: {}]
  %s7 = sld [smem:[#allocation0]]
  $region50: #{tpu_custom_call.1} parent=0
    _
  %s9 = ssub.s32 1, %s7
  %s10 = scalar_select 0, %s9, %s7
  $region1: #{tpu_custom_call.1} parent=0
    #allocation2 [shape = 'u8[131072]{0}', space=vmem, size = 0x20000, scoped, tag = 'input window, operand 0, single buffered']
    #allocation3 [shape = 's32[1]{0}', space=sflag, size = 0x4, scoped, tag = 'scoped memory for tpu_custom_call.1']
    #allocation4 [shape = 's32[1]{0}', space=sflag, size = 0x4, scoped, tag = 'scoped memory for tpu_custom_call.1']
    #allocation5 [shape = 'u8[65536]{0}', space=vmem, size = 0x10000, scoped, tag = 'input window, operand 1, single buffered']
    #allocation6 [shape = 's32[1]{0}', space=sflag, size = 0x4, scoped, tag = 'scoped memory for tpu_custom_call.1']
    #allocation7 [shape = 'u8[32768]{0}', space=vmem, size = 0x8000, scoped, tag = 'input window, operand 2, single buffered']
    #allocation8 [shape = 'u8[32768]{0}', space=vmem, size = 0x8000, scoped, tag = 'input window, operand 4, single buffered']
    #allocation9 [shape = 's32[1]{0}', space=sflag, size = 0x4, scoped, tag = 'scoped memory for tpu_custom_call.1']
    #allocation10 [shape = 'u8[131072]{0}', space=vmem, size = 0x20000, scoped, tag = 'output window, operand 0, single buffered']
    %11 = vsyncpa [#allocation3], 0
    %12 = vsyncpa [#allocation6], 0
    %13 = vsyncpa [#allocation9], 0
    %14 = vsyncpa [#allocation4], 0
    // Predicated region
    $region2: #{tpu_custom_call.1} parent=1 // pred_check
      _
    $region3: #{tpu_custom_call.1} parent=1 // pred_check_branch
      %16 = sbr.rel (0) target = $region5
    $region4: #{tpu_custom_call.1} parent=1 // pred_region
      %18 = vsyncadd [#allocation3], 0
      %s19 = sshll.u32 %s0, 4
      %s20 = int_to_ptr.hbm [resolvable:$true] %s19
      %s21 = sshll.u32 [#allocation2], 4
      %s22 = int_to_ptr.vmem [resolvable:$true] %s21
      %27 = dma.hbm_to_vmem [thread:$0]  %s20, 4096, %s22, [#allocation3], 128, 128, 8
    $region5: #{tpu_custom_call.1} parent=1 // pred_fallthru
      _
    // Predicated region
    $region6: #{tpu_custom_call.1} parent=1 // pred_check
      _
    $region7: #{tpu_custom_call.1} parent=1 // pred_check_branch
      %29 = sbr.rel (0) target = $region9
    $region8: #{tpu_custom_call.1} parent=1 // pred_region
      %31 = vsyncadd [#allocation6], 0
      %s32 = sshll.u32 %s1, 4
      %s33 = int_to_ptr.hbm [resolvable:$true] %s32
      %s34 = sshll.u32 [#allocation5], 4
      %s35 = int_to_ptr.vmem [resolvable:$true] %s34
      %40 = dma.hbm_to_vmem [thread:$0]  %s33, 2048, %s35, [#allocation6], 64, 64, 4
    $region9: #{tpu_custom_call.1} parent=1 // pred_fallthru
      _
    // Predicated region
    $region10: #{tpu_custom_call.1} parent=1 // pred_check
      _
    $region11: #{tpu_custom_call.1} parent=1 // pred_check_branch
      %42 = sbr.rel (0) target = $region13
    $region12: #{tpu_custom_call.1} parent=1 // pred_region
      %44 = vsyncadd [#allocation6], 0
      %s45 = sshll.u32 %s2, 4
      %s46 = int_to_ptr.hbm [resolvable:$true] %s45
      %s47 = sshll.u32 [#allocation7], 4
      %s48 = int_to_ptr.vmem [resolvable:$true] %s47
      %53 = dma.hbm_to_vmem [thread:$0]  %s46, 1024, %s48, [#allocation6], 64, 64, 4
    $region13: #{tpu_custom_call.1} parent=1 // pred_fallthru
      _
    // Predicated region
    $region14: #{tpu_custom_call.1} parent=1 // pred_check
      _
    $region15: #{tpu_custom_call.1} parent=1 // pred_check_branch
      %55 = sbr.rel (0) target = $region17
    $region16: #{tpu_custom_call.1} parent=1 // pred_region
      _
    $region17: #{tpu_custom_call.1} parent=1 // pred_fallthru
      _
    // Predicated region
    $region18: #{tpu_custom_call.1} parent=1 // pred_check
      _
    $region19: #{tpu_custom_call.1} parent=1 // pred_check_branch
      %57 = sbr.rel (0) target = $region21
    $region20: #{tpu_custom_call.1} parent=1 // pred_region
      %59 = vsyncadd [#allocation9], 0
      %s60 = sshll.u32 %s4, 4
      %s61 = int_to_ptr.hbm [resolvable:$true] %s60
      %s62 = sshll.u32 [#allocation8], 4
      %s63 = int_to_ptr.vmem [resolvable:$true] %s62
      %68 = dma.hbm_to_vmem [thread:$0]  %s61, 1024, %s63, [#allocation9], 64, 64, 4
    $region21: #{tpu_custom_call.1} parent=1 // pred_fallthru
      _
    // Predicated region
    $region22: #{tpu_custom_call.1} parent=1 // pred_check
      _
    $region23: #{tpu_custom_call.1} parent=1 // pred_check_branch
      %70 = sbr.rel (0) target = $region25
    $region24: #{tpu_custom_call.1} parent=1 // pred_region
      _
    $region25: #{tpu_custom_call.1} parent=1 // pred_fallthru
      _
    // Predicated region
    $region26: #{tpu_custom_call.1} parent=1 // pred_check
      _
    $region27: #{tpu_custom_call.1} parent=1 // pred_check_branch
      %72 = sbr.rel (0) target = $region29
    $region28: #{tpu_custom_call.1} parent=1 // pred_region
      %74 = dma.done [#allocation3], 4096
    $region29: #{tpu_custom_call.1} parent=1 // pred_fallthru
      _
    // Predicated region
    $region30: #{tpu_custom_call.1} parent=1 // pred_check
      _
    $region31: #{tpu_custom_call.1} parent=1 // pred_check_branch
      %76 = sbr.rel (0) target = $region33
    $region32: #{tpu_custom_call.1} parent=1 // pred_region
      %78 = dma.done [#allocation6], 2048
    $region33: #{tpu_custom_call.1} parent=1 // pred_fallthru
      _
    // Predicated region
    $region34: #{tpu_custom_call.1} parent=1 // pred_check
      _
    $region35: #{tpu_custom_call.1} parent=1 // pred_check_branch
      %80 = sbr.rel (0) target = $region37
    $region36: #{tpu_custom_call.1} parent=1 // pred_region
      %82 = dma.done [#allocation6], 1024
    $region37: #{tpu_custom_call.1} parent=1 // pred_fallthru
      _
    // Predicated region
    $region38: #{tpu_custom_call.1} parent=1 // pred_check
      _
    $region39: #{tpu_custom_call.1} parent=1 // pred_check_branch
      %84 = sbr.rel (0) target = $region41
    $region40: #{tpu_custom_call.1} parent=1 // pred_region
      %86 = dma.done [#allocation9], 1024
    $region41: #{tpu_custom_call.1} parent=1 // pred_fallthru
      _
    %v87 = vld [vmem:[#allocation5] sm:$0xf]
    %v88 = vld [vmem:[#allocation5 + $0x4] sm:$0xf]
    %v89 = vld [vmem:[#allocation5 + $0x8] sm:$0xf]
    %v90 = vld [vmem:[#allocation5 + $0xc] sm:$0xf]
    %v91 = vld [vmem:[#allocation5 + $0x10] sm:$0xf]
    %v92 = vld [vmem:[#allocation5 + $0x14] sm:$0xf]
    %v93 = vld [vmem:[#allocation5 + $0x18] sm:$0xf]
    %v94 = vld [vmem:[#allocation5 + $0x1c] sm:$0xf]
    %v95 = vld [vmem:[#allocation5 + $0x20] sm:$0xf]
    %v96 = vld [vmem:[#allocation5 + $0x24] sm:$0xf]
    %v97 = vld [vmem:[#allocation5 + $0x28] sm:$0xf]
    %v98 = vld [vmem:[#allocation5 + $0x2c] sm:$0xf]
    %v99 = vld [vmem:[#allocation5 + $0x30] sm:$0xf]
    %v100 = vld [vmem:[#allocation5 + $0x34] sm:$0xf]
    %v101 = vld [vmem:[#allocation5 + $0x38] sm:$0xf]
    %v102 = vld [vmem:[#allocation5 + $0x3c] sm:$0xf]
    %v103 = vld [vmem:[#allocation5 + $0x40] sm:$0xf]
    %v104 = vld [vmem:[#allocation5 + $0x44] sm:$0xf]
    %v105 = vld [vmem:[#allocation5 + $0x48] sm:$0xf]
    %v106 = vld [vmem:[#allocation5 + $0x4c] sm:$0xf]
    %v107 = vld [vmem:[#allocation5 + $0x50] sm:$0xf]
    %v108 = vld [vmem:[#allocation5 + $0x54] sm:$0xf]
    %v109 = vld [vmem:[#allocation5 + $0x58] sm:$0xf]
    %v110 = vld [vmem:[#allocation5 + $0x5c] sm:$0xf]
    %v111 = vld [vmem:[#allocation5 + $0x60] sm:$0xf]
    %v112 = vld [vmem:[#allocation5 + $0x64] sm:$0xf]
    %v113 = vld [vmem:[#allocation5 + $0x68] sm:$0xf]
    %v114 = vld [vmem:[#allocation5 + $0x6c] sm:$0xf]
    %v115 = vld [vmem:[#allocation5 + $0x70] sm:$0xf]
    %v116 = vld [vmem:[#allocation5 + $0x74] sm:$0xf]
    %v117 = vld [vmem:[#allocation5 + $0x78] sm:$0xf]
    %v118 = vld [vmem:[#allocation5 + $0x7c] sm:$0xf]
    %v119 = vld [vmem:[#allocation7] sm:$0xf]
    %v120 = vld [vmem:[#allocation7 + $0x4] sm:$0xf]
    %v121 = vld [vmem:[#allocation7 + $0x8] sm:$0xf]
    %v122 = vld [vmem:[#allocation7 + $0xc] sm:$0xf]
    %v123 = vld [vmem:[#allocation7 + $0x10] sm:$0xf]
    %v124 = vld [vmem:[#allocation7 + $0x14] sm:$0xf]
    %v125 = vld [vmem:[#allocation7 + $0x18] sm:$0xf]
    %v126 = vld [vmem:[#allocation7 + $0x1c] sm:$0xf]
    %v127 = vld [vmem:[#allocation7 + $0x20] sm:$0xf]
    %v128 = vld [vmem:[#allocation7 + $0x24] sm:$0xf]
    %v129 = vld [vmem:[#allocation7 + $0x28] sm:$0xf]
    %v130 = vld [vmem:[#allocation7 + $0x2c] sm:$0xf]
    %v131 = vld [vmem:[#allocation7 + $0x30] sm:$0xf]
    %v132 = vld [vmem:[#allocation7 + $0x34] sm:$0xf]
    %v133 = vld [vmem:[#allocation7 + $0x38] sm:$0xf]
    %v134 = vld [vmem:[#allocation7 + $0x3c] sm:$0xf]
    %v167 = vunpack.c.l.b16 %v87
    %v168 = vunpack.c.l.b16 %v88
    %v169 = vunpack.c.l.b16 %v89
    %v170 = vunpack.c.l.b16 %v90
    %v171 = vunpack.c.l.b16 %v91
    %v172 = vunpack.c.l.b16 %v92
    %v173 = vunpack.c.l.b16 %v93
    %v174 = vunpack.c.l.b16 %v94
    %v175 = vunpack.c.l.b16 %v95
    %v176 = vunpack.c.l.b16 %v96
    %v177 = vunpack.c.l.b16 %v97
    %v178 = vunpack.c.l.b16 %v98
    %v179 = vunpack.c.l.b16 %v99
    %v180 = vunpack.c.l.b16 %v100
    %v181 = vunpack.c.l.b16 %v101
    %v182 = vunpack.c.l.b16 %v102
    %v183 = vunpack.c.l.b16 %v103
    %v184 = vunpack.c.l.b16 %v104
    %v185 = vunpack.c.l.b16 %v105
    %v186 = vunpack.c.l.b16 %v106
    %v187 = vunpack.c.l.b16 %v107
    %v188 = vunpack.c.l.b16 %v108
    %v189 = vunpack.c.l.b16 %v109
    %v190 = vunpack.c.l.b16 %v110
    %v191 = vunpack.c.l.b16 %v111
    %v192 = vunpack.c.l.b16 %v112
    %v193 = vunpack.c.l.b16 %v113
    %v194 = vunpack.c.l.b16 %v114
    %v195 = vunpack.c.l.b16 %v115
    %v196 = vunpack.c.l.b16 %v116
    %v197 = vunpack.c.l.b16 %v117
    %v198 = vunpack.c.l.b16 %v118
    %v199 = vpack.c.b16 %v168, %v167
    %v200 = vpack.c.b16 %v170, %v169
    %v201 = vpack.c.b16 %v172, %v171
    %v202 = vpack.c.b16 %v174, %v173
    %v203 = vpack.c.b16 %v176, %v175
    %v204 = vpack.c.b16 %v178, %v177
    %v205 = vpack.c.b16 %v180, %v179
    %v206 = vpack.c.b16 %v182, %v181
    %v207 = vpack.c.b16 %v184, %v183
    %v208 = vpack.c.b16 %v186, %v185
    %v209 = vpack.c.b16 %v188, %v187
    %v210 = vpack.c.b16 %v190, %v189
    %v211 = vpack.c.b16 %v192, %v191
    %v212 = vpack.c.b16 %v194, %v193
    %v213 = vpack.c.b16 %v196, %v195
    %v214 = vpack.c.b16 %v198, %v197
    %v247 = vunpack.c.l.b16 %v119
    %v248 = vunpack.c.l.b16 %v120
    %v249 = vunpack.c.l.b16 %v121
    %v250 = vunpack.c.l.b16 %v122
    %v251 = vunpack.c.l.b16 %v123
    %v252 = vunpack.c.l.b16 %v124
    %v253 = vunpack.c.l.b16 %v125
    %v254 = vunpack.c.l.b16 %v126
    %v255 = vunpack.c.l.b16 %v127
    %v256 = vunpack.c.l.b16 %v128
    %v257 = vunpack.c.l.b16 %v129
    %v258 = vunpack.c.l.b16 %v130
    %v259 = vunpack.c.l.b16 %v131
    %v260 = vunpack.c.l.b16 %v132
    %v261 = vunpack.c.l.b16 %v133
    %v262 = vunpack.c.l.b16 %v134
    %v263 = vpack.c.b16 %v248, %v247
    %v264 = vpack.c.b16 %v250, %v249
    %v265 = vpack.c.b16 %v252, %v251
    %v266 = vpack.c.b16 %v254, %v253
    %v267 = vpack.c.b16 %v256, %v255
    %v268 = vpack.c.b16 %v258, %v257
    %v269 = vpack.c.b16 %v260, %v259
    %v270 = vpack.c.b16 %v262, %v261
    %279 = vmatpush.bf16.msra.mxu0 %v270
    %280 = vmatpush.bf16.msra.mxu0 %v269
    %281 = vmatpush.bf16.msra.mxu0 %v268
    %282 = vmatpush.bf16.msra.mxu0 %v267
    %283 = vmatpush.bf16.msra.mxu0 %v266
    %284 = vmatpush.bf16.msra.mxu0 %v265
    %285 = vmatpush.bf16.msra.mxu0 %v264
    %286 = vmatpush.bf16.msra.mxu0 %v263
    %287 = vmatmul.bf16.gmra.mxu0 %v199
    %v288 = vpop.f32.mrf.mxu0
    %v289 = vadd.f32 0.0, %v288
    %v290 = vpop.f32.mrf.mxu0
    %v291 = vadd.f32 0.0, %v290
    %292 = vmatmul.bf16.gmra.mxu0 %v200
    %v293 = vpop.f32.mrf.mxu0
    %v294 = vadd.f32 0.0, %v293
    %v295 = vpop.f32.mrf.mxu0
    %v296 = vadd.f32 0.0, %v295
    %297 = vmatmul.bf16.gmra.mxu0 %v201
    %v298 = vpop.f32.mrf.mxu0
    %v299 = vadd.f32 0.0, %v298
    %v300 = vpop.f32.mrf.mxu0
    %v301 = vadd.f32 0.0, %v300
    %302 = vmatmul.bf16.gmra.mxu0 %v202
    %v303 = vpop.f32.mrf.mxu0
    %v304 = vadd.f32 0.0, %v303
    %v305 = vpop.f32.mrf.mxu0
    %v306 = vadd.f32 0.0, %v305
    %307 = vmatmul.bf16.gmra.mxu0 %v203
    %v308 = vpop.f32.mrf.mxu0
    %v309 = vadd.f32 0.0, %v308
    %v310 = vpop.f32.mrf.mxu0
    %v311 = vadd.f32 0.0, %v310
    %312 = vmatmul.bf16.gmra.mxu0 %v204
    %v313 = vpop.f32.mrf.mxu0
    %v314 = vadd.f32 0.0, %v313
    %v315 = vpop.f32.mrf.mxu0
    %v316 = vadd.f32 0.0, %v315
    %317 = vmatmul.bf16.gmra.mxu0 %v205
    %v318 = vpop.f32.mrf.mxu0
    %v319 = vadd.f32 0.0, %v318
    %v320 = vpop.f32.mrf.mxu0
    %v321 = vadd.f32 0.0, %v320
    %322 = vmatmul.bf16.gmra.mxu0 %v206
    %v323 = vpop.f32.mrf.mxu0
    %v324 = vadd.f32 0.0, %v323
    %v325 = vpop.f32.mrf.mxu0
    %v326 = vadd.f32 0.0, %v325
    %327 = vmatmul.bf16.gmra.mxu0 %v207
    %v328 = vpop.f32.mrf.mxu0
    %v329 = vadd.f32 0.0, %v328
    %v330 = vpop.f32.mrf.mxu0
    %v331 = vadd.f32 0.0, %v330
    %332 = vmatmul.bf16.gmra.mxu0 %v208
    %v333 = vpop.f32.mrf.mxu0
    %v334 = vadd.f32 0.0, %v333
    %v335 = vpop.f32.mrf.mxu0
    %v336 = vadd.f32 0.0, %v335
    %337 = vmatmul.bf16.gmra.mxu0 %v209
    %v338 = vpop.f32.mrf.mxu0
    %v339 = vadd.f32 0.0, %v338
    %v340 = vpop.f32.mrf.mxu0
    %v341 = vadd.f32 0.0, %v340
    %342 = vmatmul.bf16.gmra.mxu0 %v210
    %v343 = vpop.f32.mrf.mxu0
    %v344 = vadd.f32 0.0, %v343
    %v345 = vpop.f32.mrf.mxu0
    %v346 = vadd.f32 0.0, %v345
    %347 = vmatmul.bf16.gmra.mxu0 %v211
    %v348 = vpop.f32.mrf.mxu0
    %v349 = vadd.f32 0.0, %v348
    %v350 = vpop.f32.mrf.mxu0
    %v351 = vadd.f32 0.0, %v350
    %352 = vmatmul.bf16.gmra.mxu0 %v212
    %v353 = vpop.f32.mrf.mxu0
    %v354 = vadd.f32 0.0, %v353
    %v355 = vpop.f32.mrf.mxu0
    %v356 = vadd.f32 0.0, %v355
    %357 = vmatmul.bf16.gmra.mxu0 %v213
    %v358 = vpop.f32.mrf.mxu0
    %v359 = vadd.f32 0.0, %v358
    %v360 = vpop.f32.mrf.mxu0
    %v361 = vadd.f32 0.0, %v360
    %362 = vmatmul.bf16.gmra.mxu0 %v214
    %v363 = vpop.f32.mrf.mxu0
    %v364 = vadd.f32 0.0, %v363
    %v365 = vpop.f32.mrf.mxu0
    %v366 = vadd.f32 0.0, %v365
    %367 = vdwg.mxu0
    %v368 = vld [vmem:[#allocation2] sm:$0xff]
    %v369 = vld [vmem:[#allocation2 + $0x8] sm:$0xff]
    %v370 = vld [vmem:[#allocation2 + $0x10] sm:$0xff]
    %v371 = vld [vmem:[#allocation2 + $0x18] sm:$0xff]
    %v372 = vld [vmem:[#allocation2 + $0x20] sm:$0xff]
    %v373 = vld [vmem:[#allocation2 + $0x28] sm:$0xff]
    %v374 = vld [vmem:[#allocation2 + $0x30] sm:$0xff]
    %v375 = vld [vmem:[#allocation2 + $0x38] sm:$0xff]
    %v376 = vld [vmem:[#allocation2 + $0x40] sm:$0xff]
    %v377 = vld [vmem:[#allocation2 + $0x48] sm:$0xff]
    %v378 = vld [vmem:[#allocation2 + $0x50] sm:$0xff]
    %v379 = vld [vmem:[#allocation2 + $0x58] sm:$0xff]
    %v380 = vld [vmem:[#allocation2 + $0x60] sm:$0xff]
    %v381 = vld [vmem:[#allocation2 + $0x68] sm:$0xff]
    %v382 = vld [vmem:[#allocation2 + $0x70] sm:$0xff]
    %v383 = vld [vmem:[#allocation2 + $0x78] sm:$0xff]
    %v384 = vld [vmem:[#allocation2 + $0x80] sm:$0xff]
    %v385 = vld [vmem:[#allocation2 + $0x88] sm:$0xff]
    %v386 = vld [vmem:[#allocation2 + $0x90] sm:$0xff]
    %v387 = vld [vmem:[#allocation2 + $0x98] sm:$0xff]
    %v388 = vld [vmem:[#allocation2 + $0xa0] sm:$0xff]
    %v389 = vld [vmem:[#allocation2 + $0xa8] sm:$0xff]
    %v390 = vld [vmem:[#allocation2 + $0xb0] sm:$0xff]
    %v391 = vld [vmem:[#allocation2 + $0xb8] sm:$0xff]
    %v392 = vld [vmem:[#allocation2 + $0xc0] sm:$0xff]
    %v393 = vld [vmem:[#allocation2 + $0xc8] sm:$0xff]
    %v394 = vld [vmem:[#allocation2 + $0xd0] sm:$0xff]
    %v395 = vld [vmem:[#allocation2 + $0xd8] sm:$0xff]
    %v396 = vld [vmem:[#allocation2 + $0xe0] sm:$0xff]
    %v397 = vld [vmem:[#allocation2 + $0xe8] sm:$0xff]
    %v398 = vld [vmem:[#allocation2 + $0xf0] sm:$0xff]
    %v399 = vld [vmem:[#allocation2 + $0xf8] sm:$0xff]
    %v400 = vpack.c.bf16 %v291, %v289
    %v401 = vpack.c.bf16 %v296, %v294
    %v402 = vpack.c.bf16 %v301, %v299
    %v403 = vpack.c.bf16 %v306, %v304
    %v404 = vpack.c.bf16 %v311, %v309
    %v405 = vpack.c.bf16 %v316, %v314
    %v406 = vpack.c.bf16 %v321, %v319
    %v407 = vpack.c.bf16 %v326, %v324
    %v408 = vpack.c.bf16 %v331, %v329
    %v409 = vpack.c.bf16 %v336, %v334
    %v410 = vpack.c.bf16 %v341, %v339
    %v411 = vpack.c.bf16 %v346, %v344
    %v412 = vpack.c.bf16 %v351, %v349
    %v413 = vpack.c.bf16 %v356, %v354
    %v414 = vpack.c.bf16 %v361, %v359
    %v415 = vpack.c.bf16 %v366, %v364
    %v416 = vld [vmem:[%s3] sm:$0x1]
    %v418 = vperm.slane %v416, 0
    %v452 = vunpack.c.l.b16 %v368
    %v453 = vunpack.c.h.b16 %v368
    %v454 = vunpack.c.l.b16 %v369
    %v455 = vunpack.c.h.b16 %v369
    %v456 = vunpack.c.l.b16 %v370
    %v457 = vunpack.c.h.b16 %v370
    %v458 = vunpack.c.l.b16 %v371
    %v459 = vunpack.c.h.b16 %v371
    %v460 = vunpack.c.l.b16 %v372
    %v461 = vunpack.c.h.b16 %v372
    %v462 = vunpack.c.l.b16 %v373
    %v463 = vunpack.c.h.b16 %v373
    %v464 = vunpack.c.l.b16 %v374
    %v465 = vunpack.c.h.b16 %v374
    %v466 = vunpack.c.l.b16 %v375
    %v467 = vunpack.c.h.b16 %v375
    %v468 = vunpack.c.l.b16 %v376
    %v469 = vunpack.c.h.b16 %v376
    %v470 = vunpack.c.l.b16 %v377
    %v471 = vunpack.c.h.b16 %v377
    %v472 = vunpack.c.l.b16 %v378
    %v473 = vunpack.c.h.b16 %v378
    %v474 = vunpack.c.l.b16 %v379
    %v475 = vunpack.c.h.b16 %v379
    %v476 = vunpack.c.l.b16 %v380
    %v477 = vunpack.c.h.b16 %v380
    %v478 = vunpack.c.l.b16 %v381
    %v479 = vunpack.c.h.b16 %v381
    %v480 = vunpack.c.l.b16 %v382
    %v481 = vunpack.c.h.b16 %v382
    %v482 = vunpack.c.l.b16 %v383
    %v483 = vunpack.c.h.b16 %v383
    %v484 = vunpack.c.l.b16 %v384
    %v485 = vunpack.c.h.b16 %v384
    %v486 = vunpack.c.l.b16 %v385
    %v487 = vunpack.c.h.b16 %v385
    %v488 = vunpack.c.l.b16 %v386
    %v489 = vunpack.c.h.b16 %v386
    %v490 = vunpack.c.l.b16 %v387
    %v491 = vunpack.c.h.b16 %v387
    %v492 = vunpack.c.l.b16 %v388
    %v493 = vunpack.c.h.b16 %v388
    %v494 = vunpack.c.l.b16 %v389
    %v495 = vunpack.c.h.b16 %v389
    %v496 = vunpack.c.l.b16 %v390
    %v497 = vunpack.c.h.b16 %v390
    %v498 = vunpack.c.l.b16 %v391
    %v499 = vunpack.c.h.b16 %v391
    %v500 = vunpack.c.l.b16 %v392
    %v501 = vunpack.c.h.b16 %v392
    %v502 = vunpack.c.l.b16 %v393
    %v503 = vunpack.c.h.b16 %v393
    %v504 = vunpack.c.l.b16 %v394
    %v505 = vunpack.c.h.b16 %v394
    %v506 = vunpack.c.l.b16 %v395
    %v507 = vunpack.c.h.b16 %v395
    %v508 = vunpack.c.l.b16 %v396
    %v509 = vunpack.c.h.b16 %v396
    %v510 = vunpack.c.l.b16 %v397
    %v511 = vunpack.c.h.b16 %v397
    %v512 = vunpack.c.l.b16 %v398
    %v513 = vunpack.c.h.b16 %v398
    %v514 = vunpack.c.l.b16 %v399
    %v515 = vunpack.c.h.b16 %v399
    %v516 = vpack.c.b16 %v454, %v452
    %v517 = vpack.c.b16 %v455, %v453
    %v518 = vpack.c.b16 %v458, %v456
    %v519 = vpack.c.b16 %v459, %v457
    %v520 = vpack.c.b16 %v462, %v460
    %v521 = vpack.c.b16 %v463, %v461
    %v522 = vpack.c.b16 %v466, %v464
    %v523 = vpack.c.b16 %v467, %v465
    %v524 = vpack.c.b16 %v470, %v468
    %v525 = vpack.c.b16 %v471, %v469
    %v526 = vpack.c.b16 %v474, %v472
    %v527 = vpack.c.b16 %v475, %v473
    %v528 = vpack.c.b16 %v478, %v476
    %v529 = vpack.c.b16 %v479, %v477
    %v530 = vpack.c.b16 %v482, %v480
    %v531 = vpack.c.b16 %v483, %v481
    %v532 = vpack.c.b16 %v486, %v484
    %v533 = vpack.c.b16 %v487, %v485
    %v534 = vpack.c.b16 %v490, %v488
    %v535 = vpack.c.b16 %v491, %v489
    %v536 = vpack.c.b16 %v494, %v492
    %v537 = vpack.c.b16 %v495, %v493
    %v538 = vpack.c.b16 %v498, %v496
    %v539 = vpack.c.b16 %v499, %v497
    %v540 = vpack.c.b16 %v502, %v500
    %v541 = vpack.c.b16 %v503, %v501
    %v542 = vpack.c.b16 %v506, %v504
    %v543 = vpack.c.b16 %v507, %v505
    %v544 = vpack.c.b16 %v510, %v508
    %v545 = vpack.c.b16 %v511, %v509
    %v546 = vpack.c.b16 %v514, %v512
    %v547 = vpack.c.b16 %v515, %v513
    %580 = vmatpush.bf16.msra.mxu0 %v407
    %581 = vmatpush.bf16.msra.mxu0 %v406
    %582 = vmatpush.bf16.msra.mxu0 %v405
    %583 = vmatpush.bf16.msra.mxu0 %v404
    %584 = vmatpush.bf16.msra.mxu0 %v403
    %585 = vmatpush.bf16.msra.mxu0 %v402
    %586 = vmatpush.bf16.msra.mxu0 %v401
    %587 = vmatpush.bf16.msra.mxu0 %v400
    %588 = vmatmul.bf16.gmra.mxu0 %v516
    %v589 = vpop.f32.mrf.mxu0
    %v590 = vadd.f32 %v418, %v589
    %v591 = vpop.f32.mrf.mxu0
    %v592 = vadd.f32 %v418, %v591
    %593 = vmatmul.bf16.gmra.mxu0 %v518
    %v594 = vpop.f32.mrf.mxu0
    %v595 = vadd.f32 %v418, %v594
    %v596 = vpop.f32.mrf.mxu0
    %v597 = vadd.f32 %v418, %v596
    %598 = vmatmul.bf16.gmra.mxu0 %v520
    %v599 = vpop.f32.mrf.mxu0
    %v600 = vadd.f32 %v418, %v599
    %v601 = vpop.f32.mrf.mxu0
    %v602 = vadd.f32 %v418, %v601
    %603 = vmatmul.bf16.gmra.mxu0 %v522
    %v604 = vpop.f32.mrf.mxu0
    %v605 = vadd.f32 %v418, %v604
    %v606 = vpop.f32.mrf.mxu0
    %v607 = vadd.f32 %v418, %v606
    %608 = vmatmul.bf16.gmra.mxu0 %v524
    %v609 = vpop.f32.mrf.mxu0
    %v610 = vadd.f32 %v418, %v609
    %v611 = vpop.f32.mrf.mxu0
    %v612 = vadd.f32 %v418, %v611
    %613 = vmatmul.bf16.gmra.mxu0 %v526
    %v614 = vpop.f32.mrf.mxu0
    %v615 = vadd.f32 %v418, %v614
    %v616 = vpop.f32.mrf.mxu0
    %v617 = vadd.f32 %v418, %v616
    %618 = vmatmul.bf16.gmra.mxu0 %v528
    %v619 = vpop.f32.mrf.mxu0
    %v620 = vadd.f32 %v418, %v619
    %v621 = vpop.f32.mrf.mxu0
    %v622 = vadd.f32 %v418, %v621
    %623 = vmatmul.bf16.gmra.mxu0 %v530
    %v624 = vpop.f32.mrf.mxu0
    %v625 = vadd.f32 %v418, %v624
    %v626 = vpop.f32.mrf.mxu0
    %v627 = vadd.f32 %v418, %v626
    %628 = vmatmul.bf16.gmra.mxu0 %v532
    %v629 = vpop.f32.mrf.mxu0
    %v630 = vadd.f32 %v418, %v629
    %v631 = vpop.f32.mrf.mxu0
    %v632 = vadd.f32 %v418, %v631
    %633 = vmatmul.bf16.gmra.mxu0 %v534
    %v634 = vpop.f32.mrf.mxu0
    %v635 = vadd.f32 %v418, %v634
    %v636 = vpop.f32.mrf.mxu0
    %v637 = vadd.f32 %v418, %v636
    %638 = vmatmul.bf16.gmra.mxu0 %v536
    %v639 = vpop.f32.mrf.mxu0
    %v640 = vadd.f32 %v418, %v639
    %v641 = vpop.f32.mrf.mxu0
    %v642 = vadd.f32 %v418, %v641
    %643 = vmatmul.bf16.gmra.mxu0 %v538
    %v644 = vpop.f32.mrf.mxu0
    %v645 = vadd.f32 %v418, %v644
    %v646 = vpop.f32.mrf.mxu0
    %v647 = vadd.f32 %v418, %v646
    %648 = vmatmul.bf16.gmra.mxu0 %v540
    %v649 = vpop.f32.mrf.mxu0
    %v650 = vadd.f32 %v418, %v649
    %v651 = vpop.f32.mrf.mxu0
    %v652 = vadd.f32 %v418, %v651
    %653 = vmatmul.bf16.gmra.mxu0 %v542
    %v654 = vpop.f32.mrf.mxu0
    %v655 = vadd.f32 %v418, %v654
    %v656 = vpop.f32.mrf.mxu0
    %v657 = vadd.f32 %v418, %v656
    %658 = vmatmul.bf16.gmra.mxu0 %v544
    %v659 = vpop.f32.mrf.mxu0
    %v660 = vadd.f32 %v418, %v659
    %v661 = vpop.f32.mrf.mxu0
    %v662 = vadd.f32 %v418, %v661
    %663 = vmatmul.bf16.gmra.mxu0 %v546
    %v664 = vpop.f32.mrf.mxu0
    %v665 = vadd.f32 %v418, %v664
    %v666 = vpop.f32.mrf.mxu0
    %v667 = vadd.f32 %v418, %v666
    %668 = vdwg.mxu0
    %669 = vmatpush.bf16.msra.mxu0 %v415
    %670 = vmatpush.bf16.msra.mxu0 %v414
    %671 = vmatpush.bf16.msra.mxu0 %v413
    %672 = vmatpush.bf16.msra.mxu0 %v412
    %673 = vmatpush.bf16.msra.mxu0 %v411
    %674 = vmatpush.bf16.msra.mxu0 %v410
    %675 = vmatpush.bf16.msra.mxu0 %v409
    %676 = vmatpush.bf16.msra.mxu0 %v408
    %677 = vmatmul.bf16.gmra.mxu0 %v517
    %v678 = vpop.f32.mrf.mxu0
    %v679 = vadd.f32 %v590, %v678
    %v680 = vpop.f32.mrf.mxu0
    %v681 = vadd.f32 %v592, %v680
    %682 = vmatmul.bf16.gmra.mxu0 %v519
    %v683 = vpop.f32.mrf.mxu0
    %v684 = vadd.f32 %v595, %v683
    %v685 = vpop.f32.mrf.mxu0
    %v686 = vadd.f32 %v597, %v685
    %687 = vmatmul.bf16.gmra.mxu0 %v521
    %v688 = vpop.f32.mrf.mxu0
    %v689 = vadd.f32 %v600, %v688
    %v690 = vpop.f32.mrf.mxu0
    %v691 = vadd.f32 %v602, %v690
    %692 = vmatmul.bf16.gmra.mxu0 %v523
    %v693 = vpop.f32.mrf.mxu0
    %v694 = vadd.f32 %v605, %v693
    %v695 = vpop.f32.mrf.mxu0
    %v696 = vadd.f32 %v607, %v695
    %697 = vmatmul.bf16.gmra.mxu0 %v525
    %v698 = vpop.f32.mrf.mxu0
    %v699 = vadd.f32 %v610, %v698
    %v700 = vpop.f32.mrf.mxu0
    %v701 = vadd.f32 %v612, %v700
    %702 = vmatmul.bf16.gmra.mxu0 %v527
    %v703 = vpop.f32.mrf.mxu0
    %v704 = vadd.f32 %v615, %v703
    %v705 = vpop.f32.mrf.mxu0
    %v706 = vadd.f32 %v617, %v705
    %707 = vmatmul.bf16.gmra.mxu0 %v529
    %v708 = vpop.f32.mrf.mxu0
    %v709 = vadd.f32 %v620, %v708
    %v710 = vpop.f32.mrf.mxu0
    %v711 = vadd.f32 %v622, %v710
    %712 = vmatmul.bf16.gmra.mxu0 %v531
    %v713 = vpop.f32.mrf.mxu0
    %v714 = vadd.f32 %v625, %v713
    %v715 = vpop.f32.mrf.mxu0
    %v716 = vadd.f32 %v627, %v715
    %717 = vmatmul.bf16.gmra.mxu0 %v533
    %v718 = vpop.f32.mrf.mxu0
    %v719 = vadd.f32 %v630, %v718
    %v720 = vpop.f32.mrf.mxu0
    %v721 = vadd.f32 %v632, %v720
    %722 = vmatmul.bf16.gmra.mxu0 %v535
    %v723 = vpop.f32.mrf.mxu0
    %v724 = vadd.f32 %v635, %v723
    %v725 = vpop.f32.mrf.mxu0
    %v726 = vadd.f32 %v637, %v725
    %727 = vmatmul.bf16.gmra.mxu0 %v537
    %v728 = vpop.f32.mrf.mxu0
    %v729 = vadd.f32 %v640, %v728
    %v730 = vpop.f32.mrf.mxu0
    %v731 = vadd.f32 %v642, %v730
    %732 = vmatmul.bf16.gmra.mxu0 %v539
    %v733 = vpop.f32.mrf.mxu0
    %v734 = vadd.f32 %v645, %v733
    %v735 = vpop.f32.mrf.mxu0
    %v736 = vadd.f32 %v647, %v735
    %737 = vmatmul.bf16.gmra.mxu0 %v541
    %v738 = vpop.f32.mrf.mxu0
    %v739 = vadd.f32 %v650, %v738
    %v740 = vpop.f32.mrf.mxu0
    %v741 = vadd.f32 %v652, %v740
    %742 = vmatmul.bf16.gmra.mxu0 %v543
    %v743 = vpop.f32.mrf.mxu0
    %v744 = vadd.f32 %v655, %v743
    %v745 = vpop.f32.mrf.mxu0
    %v746 = vadd.f32 %v657, %v745
    %747 = vmatmul.bf16.gmra.mxu0 %v545
    %v748 = vpop.f32.mrf.mxu0
    %v749 = vadd.f32 %v660, %v748
    %v750 = vpop.f32.mrf.mxu0
    %v751 = vadd.f32 %v662, %v750
    %752 = vmatmul.bf16.gmra.mxu0 %v547
    %v753 = vpop.f32.mrf.mxu0
    %v754 = vadd.f32 %v665, %v753
    %v755 = vpop.f32.mrf.mxu0
    %v756 = vadd.f32 %v667, %v755
    %757 = vdwg.mxu0
    %v758 = vmax.f32 %v679, 0.0
    %v759 = vmax.f32 %v681, 0.0
    %v760 = vmax.f32 %v684, 0.0
    %v761 = vmax.f32 %v686, 0.0
    %v762 = vmax.f32 %v689, 0.0
    %v763 = vmax.f32 %v691, 0.0
    %v764 = vmax.f32 %v694, 0.0
    %v765 = vmax.f32 %v696, 0.0
    %v766 = vmax.f32 %v699, 0.0
    %v767 = vmax.f32 %v701, 0.0
    %v768 = vmax.f32 %v704, 0.0
    %v769 = vmax.f32 %v706, 0.0
    %v770 = vmax.f32 %v709, 0.0
    %v771 = vmax.f32 %v711, 0.0
    %v772 = vmax.f32 %v714, 0.0
    %v773 = vmax.f32 %v716, 0.0
    %v774 = vmax.f32 %v719, 0.0
    %v775 = vmax.f32 %v721, 0.0
    %v776 = vmax.f32 %v724, 0.0
    %v777 = vmax.f32 %v726, 0.0
    %v778 = vmax.f32 %v729, 0.0
    %v779 = vmax.f32 %v731, 0.0
    %v780 = vmax.f32 %v734, 0.0
    %v781 = vmax.f32 %v736, 0.0
    %v782 = vmax.f32 %v739, 0.0
    %v783 = vmax.f32 %v741, 0.0
    %v784 = vmax.f32 %v744, 0.0
    %v785 = vmax.f32 %v746, 0.0
    %v786 = vmax.f32 %v749, 0.0
    %v787 = vmax.f32 %v751, 0.0
    %v788 = vmax.f32 %v754, 0.0
    %v789 = vmax.f32 %v756, 0.0
    %v790 = vpack.c.bf16 %v759, %v758
    %v791 = vpack.c.bf16 %v761, %v760
    %v792 = vpack.c.bf16 %v763, %v762
    %v793 = vpack.c.bf16 %v765, %v764
    %v794 = vpack.c.bf16 %v767, %v766
    %v795 = vpack.c.bf16 %v769, %v768
    %v796 = vpack.c.bf16 %v771, %v770
    %v797 = vpack.c.bf16 %v773, %v772
    %v798 = vpack.c.bf16 %v775, %v774
    %v799 = vpack.c.bf16 %v777, %v776
    %v800 = vpack.c.bf16 %v779, %v778
    %v801 = vpack.c.bf16 %v781, %v780
    %v802 = vpack.c.bf16 %v783, %v782
    %v803 = vpack.c.bf16 %v785, %v784
    %v804 = vpack.c.bf16 %v787, %v786
    %v805 = vpack.c.bf16 %v789, %v788
    %v806 = vld [vmem:[#allocation8] sm:$0xf]
    %v807 = vld [vmem:[#allocation8 + $0x4] sm:$0xf]
    %v808 = vld [vmem:[#allocation8 + $0x8] sm:$0xf]
    %v809 = vld [vmem:[#allocation8 + $0xc] sm:$0xf]
    %v810 = vld [vmem:[#allocation8 + $0x10] sm:$0xf]
    %v811 = vld [vmem:[#allocation8 + $0x14] sm:$0xf]
    %v812 = vld [vmem:[#allocation8 + $0x18] sm:$0xf]
    %v813 = vld [vmem:[#allocation8 + $0x1c] sm:$0xf]
    %v814 = vld [vmem:[#allocation8 + $0x20] sm:$0xf]
    %v815 = vld [vmem:[#allocation8 + $0x24] sm:$0xf]
    %v816 = vld [vmem:[#allocation8 + $0x28] sm:$0xf]
    %v817 = vld [vmem:[#allocation8 + $0x2c] sm:$0xf]
    %v818 = vld [vmem:[#allocation8 + $0x30] sm:$0xf]
    %v819 = vld [vmem:[#allocation8 + $0x34] sm:$0xf]
    %v820 = vld [vmem:[#allocation8 + $0x38] sm:$0xf]
    %v821 = vld [vmem:[#allocation8 + $0x3c] sm:$0xf]
    %v838 = vunpack.c.l.b16 %v806
    %v839 = vunpack.c.l.b16 %v807
    %v840 = vunpack.c.l.b16 %v808
    %v841 = vunpack.c.l.b16 %v809
    %v842 = vunpack.c.l.b16 %v810
    %v843 = vunpack.c.l.b16 %v811
    %v844 = vunpack.c.l.b16 %v812
    %v845 = vunpack.c.l.b16 %v813
    %v846 = vunpack.c.l.b16 %v814
    %v847 = vunpack.c.l.b16 %v815
    %v848 = vunpack.c.l.b16 %v816
    %v849 = vunpack.c.l.b16 %v817
    %v850 = vunpack.c.l.b16 %v818
    %v851 = vunpack.c.l.b16 %v819
    %v852 = vunpack.c.l.b16 %v820
    %v853 = vunpack.c.l.b16 %v821
    %v854 = vpack.c.b16 %v839, %v838
    %v855 = vpack.c.b16 %v841, %v840
    %v856 = vpack.c.b16 %v843, %v842
    %v857 = vpack.c.b16 %v845, %v844
    %v858 = vpack.c.b16 %v847, %v846
    %v859 = vpack.c.b16 %v849, %v848
    %v860 = vpack.c.b16 %v851, %v850
    %v861 = vpack.c.b16 %v853, %v852
    %870 = vmatpush.bf16.msra.mxu0 %v861
    %871 = vmatpush.bf16.msra.mxu0 %v860
    %872 = vmatpush.bf16.msra.mxu0 %v859
    %873 = vmatpush.bf16.msra.mxu0 %v858
    %874 = vmatpush.bf16.msra.mxu0 %v857
    %875 = vmatpush.bf16.msra.mxu0 %v856
    %876 = vmatpush.bf16.msra.mxu0 %v855
    %877 = vmatpush.bf16.msra.mxu0 %v854
    %878 = vmatmul.bf16.gmra.mxu0 %v790
    %v879 = vpop.f32.mrf.mxu0
    %v880 = vadd.f32 0.0, %v879
    %v881 = vpop.f32.mrf.mxu0
    %v882 = vadd.f32 0.0, %v881
    %883 = vmatmul.bf16.gmra.mxu0 %v791
    %v884 = vpop.f32.mrf.mxu0
    %v885 = vadd.f32 0.0, %v884
    %v886 = vpop.f32.mrf.mxu0
    %v887 = vadd.f32 0.0, %v886
    %888 = vmatmul.bf16.gmra.mxu0 %v792
    %v889 = vpop.f32.mrf.mxu0
    %v890 = vadd.f32 0.0, %v889
    %v891 = vpop.f32.mrf.mxu0
    %v892 = vadd.f32 0.0, %v891
    %893 = vmatmul.bf16.gmra.mxu0 %v793
    %v894 = vpop.f32.mrf.mxu0
    %v895 = vadd.f32 0.0, %v894
    %v896 = vpop.f32.mrf.mxu0
    %v897 = vadd.f32 0.0, %v896
    %898 = vmatmul.bf16.gmra.mxu0 %v794
    %v899 = vpop.f32.mrf.mxu0
    %v900 = vadd.f32 0.0, %v899
    %v901 = vpop.f32.mrf.mxu0
    %v902 = vadd.f32 0.0, %v901
    %903 = vmatmul.bf16.gmra.mxu0 %v795
    %v904 = vpop.f32.mrf.mxu0
    %v905 = vadd.f32 0.0, %v904
    %v906 = vpop.f32.mrf.mxu0
    %v907 = vadd.f32 0.0, %v906
    %908 = vmatmul.bf16.gmra.mxu0 %v796
    %v909 = vpop.f32.mrf.mxu0
    %v910 = vadd.f32 0.0, %v909
    %v911 = vpop.f32.mrf.mxu0
    %v912 = vadd.f32 0.0, %v911
    %913 = vmatmul.bf16.gmra.mxu0 %v797
    %v914 = vpop.f32.mrf.mxu0
    %v915 = vadd.f32 0.0, %v914
    %v916 = vpop.f32.mrf.mxu0
    %v917 = vadd.f32 0.0, %v916
    %918 = vmatmul.bf16.gmra.mxu0 %v798
    %v919 = vpop.f32.mrf.mxu0
    %v920 = vadd.f32 0.0, %v919
    %v921 = vpop.f32.mrf.mxu0
    %v922 = vadd.f32 0.0, %v921
    %923 = vmatmul.bf16.gmra.mxu0 %v799
    %v924 = vpop.f32.mrf.mxu0
    %v925 = vadd.f32 0.0, %v924
    %v926 = vpop.f32.mrf.mxu0
    %v927 = vadd.f32 0.0, %v926
    %928 = vmatmul.bf16.gmra.mxu0 %v800
    %v929 = vpop.f32.mrf.mxu0
    %v930 = vadd.f32 0.0, %v929
    %v931 = vpop.f32.mrf.mxu0
    %v932 = vadd.f32 0.0, %v931
    %933 = vmatmul.bf16.gmra.mxu0 %v801
    %v934 = vpop.f32.mrf.mxu0
    %v935 = vadd.f32 0.0, %v934
    %v936 = vpop.f32.mrf.mxu0
    %v937 = vadd.f32 0.0, %v936
    %938 = vmatmul.bf16.gmra.mxu0 %v802
    %v939 = vpop.f32.mrf.mxu0
    %v940 = vadd.f32 0.0, %v939
    %v941 = vpop.f32.mrf.mxu0
    %v942 = vadd.f32 0.0, %v941
    %943 = vmatmul.bf16.gmra.mxu0 %v803
    %v944 = vpop.f32.mrf.mxu0
    %v945 = vadd.f32 0.0, %v944
    %v946 = vpop.f32.mrf.mxu0
    %v947 = vadd.f32 0.0, %v946
    %948 = vmatmul.bf16.gmra.mxu0 %v804
    %v949 = vpop.f32.mrf.mxu0
    %v950 = vadd.f32 0.0, %v949
    %v951 = vpop.f32.mrf.mxu0
    %v952 = vadd.f32 0.0, %v951
    %953 = vmatmul.bf16.gmra.mxu0 %v805
    %v954 = vpop.f32.mrf.mxu0
    %v955 = vadd.f32 0.0, %v954
    %v956 = vpop.f32.mrf.mxu0
    %v957 = vadd.f32 0.0, %v956
    %958 = vdwg.mxu0
    %v959 = vpack.c.bf16 %v882, %v880
    %v960 = vpack.c.bf16 %v887, %v885
    %v961 = vpack.c.bf16 %v892, %v890
    %v962 = vpack.c.bf16 %v897, %v895
    %v963 = vpack.c.bf16 %v902, %v900
    %v964 = vpack.c.bf16 %v907, %v905
    %v965 = vpack.c.bf16 %v912, %v910
    %v966 = vpack.c.bf16 %v917, %v915
    %v967 = vpack.c.bf16 %v922, %v920
    %v968 = vpack.c.bf16 %v927, %v925
    %v969 = vpack.c.bf16 %v932, %v930
    %v970 = vpack.c.bf16 %v937, %v935
    %v971 = vpack.c.bf16 %v942, %v940
    %v972 = vpack.c.bf16 %v947, %v945
    %v973 = vpack.c.bf16 %v952, %v950
    %v974 = vpack.c.bf16 %v957, %v955
    %v975 = vld [vmem:[%s5] sm:$0x1]
    %v977 = vperm.slane %v975, 0
    %979 = vmatpush.bf16.msra.mxu0 %v966
    %980 = vmatpush.bf16.msra.mxu0 %v965
    %981 = vmatpush.bf16.msra.mxu0 %v964
    %982 = vmatpush.bf16.msra.mxu0 %v963
    %983 = vmatpush.bf16.msra.mxu0 %v962
    %984 = vmatpush.bf16.msra.mxu0 %v961
    %985 = vmatpush.bf16.msra.mxu0 %v960
    %986 = vmatpush.bf16.msra.mxu0 %v959
    %987 = vmatmul.bf16.gmra.mxu0 %v516
    %v988 = vpop.f32.mrf.mxu0
    %v989 = vadd.f32 %v977, %v988
    %v990 = vpop.f32.mrf.mxu0
    %v991 = vadd.f32 %v977, %v990
    %992 = vmatmul.bf16.gmra.mxu0 %v518
    %v993 = vpop.f32.mrf.mxu0
    %v994 = vadd.f32 %v977, %v993
    %v995 = vpop.f32.mrf.mxu0
    %v996 = vadd.f32 %v977, %v995
    %997 = vmatmul.bf16.gmra.mxu0 %v520
    %v998 = vpop.f32.mrf.mxu0
    %v999 = vadd.f32 %v977, %v998
    %v1000 = vpop.f32.mrf.mxu0
    %v1001 = vadd.f32 %v977, %v1000
    %1002 = vmatmul.bf16.gmra.mxu0 %v522
    %v1003 = vpop.f32.mrf.mxu0
    %v1004 = vadd.f32 %v977, %v1003
    %v1005 = vpop.f32.mrf.mxu0
    %v1006 = vadd.f32 %v977, %v1005
    %1007 = vmatmul.bf16.gmra.mxu0 %v524
    %v1008 = vpop.f32.mrf.mxu0
    %v1009 = vadd.f32 %v977, %v1008
    %v1010 = vpop.f32.mrf.mxu0
    %v1011 = vadd.f32 %v977, %v1010
    %1012 = vmatmul.bf16.gmra.mxu0 %v526
    %v1013 = vpop.f32.mrf.mxu0
    %v1014 = vadd.f32 %v977, %v1013
    %v1015 = vpop.f32.mrf.mxu0
    %v1016 = vadd.f32 %v977, %v1015
    %1017 = vmatmul.bf16.gmra.mxu0 %v528
    %v1018 = vpop.f32.mrf.mxu0
    %v1019 = vadd.f32 %v977, %v1018
    %v1020 = vpop.f32.mrf.mxu0
    %v1021 = vadd.f32 %v977, %v1020
    %1022 = vmatmul.bf16.gmra.mxu0 %v530
    %v1023 = vpop.f32.mrf.mxu0
    %v1024 = vadd.f32 %v977, %v1023
    %v1025 = vpop.f32.mrf.mxu0
    %v1026 = vadd.f32 %v977, %v1025
    %1027 = vmatmul.bf16.gmra.mxu0 %v532
    %v1028 = vpop.f32.mrf.mxu0
    %v1029 = vadd.f32 %v977, %v1028
    %v1030 = vpop.f32.mrf.mxu0
    %v1031 = vadd.f32 %v977, %v1030
    %1032 = vmatmul.bf16.gmra.mxu0 %v534
    %v1033 = vpop.f32.mrf.mxu0
    %v1034 = vadd.f32 %v977, %v1033
    %v1035 = vpop.f32.mrf.mxu0
    %v1036 = vadd.f32 %v977, %v1035
    %1037 = vmatmul.bf16.gmra.mxu0 %v536
    %v1038 = vpop.f32.mrf.mxu0
    %v1039 = vadd.f32 %v977, %v1038
    %v1040 = vpop.f32.mrf.mxu0
    %v1041 = vadd.f32 %v977, %v1040
    %1042 = vmatmul.bf16.gmra.mxu0 %v538
    %v1043 = vpop.f32.mrf.mxu0
    %v1044 = vadd.f32 %v977, %v1043
    %v1045 = vpop.f32.mrf.mxu0
    %v1046 = vadd.f32 %v977, %v1045
    %1047 = vmatmul.bf16.gmra.mxu0 %v540
    %v1048 = vpop.f32.mrf.mxu0
    %v1049 = vadd.f32 %v977, %v1048
    %v1050 = vpop.f32.mrf.mxu0
    %v1051 = vadd.f32 %v977, %v1050
    %1052 = vmatmul.bf16.gmra.mxu0 %v542
    %v1053 = vpop.f32.mrf.mxu0
    %v1054 = vadd.f32 %v977, %v1053
    %v1055 = vpop.f32.mrf.mxu0
    %v1056 = vadd.f32 %v977, %v1055
    %1057 = vmatmul.bf16.gmra.mxu0 %v544
    %v1058 = vpop.f32.mrf.mxu0
    %v1059 = vadd.f32 %v977, %v1058
    %v1060 = vpop.f32.mrf.mxu0
    %v1061 = vadd.f32 %v977, %v1060
    %1062 = vmatmul.bf16.gmra.mxu0 %v546
    %v1063 = vpop.f32.mrf.mxu0
    %v1064 = vadd.f32 %v977, %v1063
    %v1065 = vpop.f32.mrf.mxu0
    %v1066 = vadd.f32 %v977, %v1065
    %1067 = vdwg.mxu0
    %1068 = vmatpush.bf16.msra.mxu0 %v974
    %1069 = vmatpush.bf16.msra.mxu0 %v973
    %1070 = vmatpush.bf16.msra.mxu0 %v972
    %1071 = vmatpush.bf16.msra.mxu0 %v971
    %1072 = vmatpush.bf16.msra.mxu0 %v970
    %1073 = vmatpush.bf16.msra.mxu0 %v969
    %1074 = vmatpush.bf16.msra.mxu0 %v968
    %1075 = vmatpush.bf16.msra.mxu0 %v967
    %1076 = vmatmul.bf16.gmra.mxu0 %v517
    %v1077 = vpop.f32.mrf.mxu0
    %v1078 = vadd.f32 %v989, %v1077
    %v1079 = vpop.f32.mrf.mxu0
    %v1080 = vadd.f32 %v991, %v1079
    %1081 = vmatmul.bf16.gmra.mxu0 %v519
    %v1082 = vpop.f32.mrf.mxu0
    %v1083 = vadd.f32 %v994, %v1082
    %v1084 = vpop.f32.mrf.mxu0
    %v1085 = vadd.f32 %v996, %v1084
    %1086 = vmatmul.bf16.gmra.mxu0 %v521
    %v1087 = vpop.f32.mrf.mxu0
    %v1088 = vadd.f32 %v999, %v1087
    %v1089 = vpop.f32.mrf.mxu0
    %v1090 = vadd.f32 %v1001, %v1089
    %1091 = vmatmul.bf16.gmra.mxu0 %v523
    %v1092 = vpop.f32.mrf.mxu0
    %v1093 = vadd.f32 %v1004, %v1092
    %v1094 = vpop.f32.mrf.mxu0
    %v1095 = vadd.f32 %v1006, %v1094
    %1096 = vmatmul.bf16.gmra.mxu0 %v525
    %v1097 = vpop.f32.mrf.mxu0
    %v1098 = vadd.f32 %v1009, %v1097
    %v1099 = vpop.f32.mrf.mxu0
    %v1100 = vadd.f32 %v1011, %v1099
    %1101 = vmatmul.bf16.gmra.mxu0 %v527
    %v1102 = vpop.f32.mrf.mxu0
    %v1103 = vadd.f32 %v1014, %v1102
    %v1104 = vpop.f32.mrf.mxu0
    %v1105 = vadd.f32 %v1016, %v1104
    %1106 = vmatmul.bf16.gmra.mxu0 %v529
    %v1107 = vpop.f32.mrf.mxu0
    %v1108 = vadd.f32 %v1019, %v1107
    %v1109 = vpop.f32.mrf.mxu0
    %v1110 = vadd.f32 %v1021, %v1109
    %1111 = vmatmul.bf16.gmra.mxu0 %v531
    %v1112 = vpop.f32.mrf.mxu0
    %v1113 = vadd.f32 %v1024, %v1112
    %v1114 = vpop.f32.mrf.mxu0
    %v1115 = vadd.f32 %v1026, %v1114
    %1116 = vmatmul.bf16.gmra.mxu0 %v533
    %v1117 = vpop.f32.mrf.mxu0
    %v1118 = vadd.f32 %v1029, %v1117
    %v1119 = vpop.f32.mrf.mxu0
    %v1120 = vadd.f32 %v1031, %v1119
    %1121 = vmatmul.bf16.gmra.mxu0 %v535
    %v1122 = vpop.f32.mrf.mxu0
    %v1123 = vadd.f32 %v1034, %v1122
    %v1124 = vpop.f32.mrf.mxu0
    %v1125 = vadd.f32 %v1036, %v1124
    %1126 = vmatmul.bf16.gmra.mxu0 %v537
    %v1127 = vpop.f32.mrf.mxu0
    %v1128 = vadd.f32 %v1039, %v1127
    %v1129 = vpop.f32.mrf.mxu0
    %v1130 = vadd.f32 %v1041, %v1129
    %1131 = vmatmul.bf16.gmra.mxu0 %v539
    %v1132 = vpop.f32.mrf.mxu0
    %v1133 = vadd.f32 %v1044, %v1132
    %v1134 = vpop.f32.mrf.mxu0
    %v1135 = vadd.f32 %v1046, %v1134
    %1136 = vmatmul.bf16.gmra.mxu0 %v541
    %v1137 = vpop.f32.mrf.mxu0
    %v1138 = vadd.f32 %v1049, %v1137
    %v1139 = vpop.f32.mrf.mxu0
    %v1140 = vadd.f32 %v1051, %v1139
    %1141 = vmatmul.bf16.gmra.mxu0 %v543
    %v1142 = vpop.f32.mrf.mxu0
    %v1143 = vadd.f32 %v1054, %v1142
    %v1144 = vpop.f32.mrf.mxu0
    %v1145 = vadd.f32 %v1056, %v1144
    %1146 = vmatmul.bf16.gmra.mxu0 %v545
    %v1147 = vpop.f32.mrf.mxu0
    %v1148 = vadd.f32 %v1059, %v1147
    %v1149 = vpop.f32.mrf.mxu0
    %v1150 = vadd.f32 %v1061, %v1149
    %1151 = vmatmul.bf16.gmra.mxu0 %v547
    %v1152 = vpop.f32.mrf.mxu0
    %v1153 = vadd.f32 %v1064, %v1152
    %v1154 = vpop.f32.mrf.mxu0
    %v1155 = vadd.f32 %v1066, %v1154
    %1156 = vdwg.mxu0
    %1157 = vst [vmem:[#allocation10] sm:$0xff] %v1078
    %1158 = vst [vmem:[#allocation10 + $0x8] sm:$0xff] %v1080
    %1159 = vst [vmem:[#allocation10 + $0x10] sm:$0xff] %v1083
    %1160 = vst [vmem:[#allocation10 + $0x18] sm:$0xff] %v1085
    %1161 = vst [vmem:[#allocation10 + $0x20] sm:$0xff] %v1088
    %1162 = vst [vmem:[#allocation10 + $0x28] sm:$0xff] %v1090
    %1163 = vst [vmem:[#allocation10 + $0x30] sm:$0xff] %v1093
    %1164 = vst [vmem:[#allocation10 + $0x38] sm:$0xff] %v1095
    %1165 = vst [vmem:[#allocation10 + $0x40] sm:$0xff] %v1098
    %1166 = vst [vmem:[#allocation10 + $0x48] sm:$0xff] %v1100
    %1167 = vst [vmem:[#allocation10 + $0x50] sm:$0xff] %v1103
    %1168 = vst [vmem:[#allocation10 + $0x58] sm:$0xff] %v1105
    %1169 = vst [vmem:[#allocation10 + $0x60] sm:$0xff] %v1108
    %1170 = vst [vmem:[#allocation10 + $0x68] sm:$0xff] %v1110
    %1171 = vst [vmem:[#allocation10 + $0x70] sm:$0xff] %v1113
    %1172 = vst [vmem:[#allocation10 + $0x78] sm:$0xff] %v1115
    %1173 = vst [vmem:[#allocation10 + $0x80] sm:$0xff] %v1118
    %1174 = vst [vmem:[#allocation10 + $0x88] sm:$0xff] %v1120
    %1175 = vst [vmem:[#allocation10 + $0x90] sm:$0xff] %v1123
    %1176 = vst [vmem:[#allocation10 + $0x98] sm:$0xff] %v1125
    %1177 = vst [vmem:[#allocation10 + $0xa0] sm:$0xff] %v1128
    %1178 = vst [vmem:[#allocation10 + $0xa8] sm:$0xff] %v1130
    %1179 = vst [vmem:[#allocation10 + $0xb0] sm:$0xff] %v1133
    %1180 = vst [vmem:[#allocation10 + $0xb8] sm:$0xff] %v1135
    %1181 = vst [vmem:[#allocation10 + $0xc0] sm:$0xff] %v1138
    %1182 = vst [vmem:[#allocation10 + $0xc8] sm:$0xff] %v1140
    %1183 = vst [vmem:[#allocation10 + $0xd0] sm:$0xff] %v1143
    %1184 = vst [vmem:[#allocation10 + $0xd8] sm:$0xff] %v1145
    %1185 = vst [vmem:[#allocation10 + $0xe0] sm:$0xff] %v1148
    %1186 = vst [vmem:[#allocation10 + $0xe8] sm:$0xff] %v1150
    %1187 = vst [vmem:[#allocation10 + $0xf0] sm:$0xff] %v1153
    %1188 = vst [vmem:[#allocation10 + $0xf8] sm:$0xff] %v1155
    // Predicated region
    $region42: #{tpu_custom_call.1} parent=1 // pred_check
      _
    $region43: #{tpu_custom_call.1} parent=1 // pred_check_branch
      %1190 = sbr.rel (0) target = $region45
    $region44: #{tpu_custom_call.1} parent=1 // pred_region
      %1192 = vsyncadd [#allocation4], 0
      %s1193 = sshll.u32 [#allocation10], 4
      %s1194 = int_to_ptr.vmem [resolvable:$true] %s1193
      %s1195 = sshll.u32 %s6, 4
      %s1196 = int_to_ptr.hbm [resolvable:$true] %s1195
      %1201 = dma.vmem_to_hbm [thread:$0]  %s1194, 4096, %s1196, [#allocation4], 128, 128, 8
    $region45: #{tpu_custom_call.1} parent=1 // pred_fallthru
      _
    // Predicated region
    $region46: #{tpu_custom_call.1} parent=1 // pred_check
      _
    $region47: #{tpu_custom_call.1} parent=1 // pred_check_branch
      %1203 = sbr.rel (0) target = $region49
    $region48: #{tpu_custom_call.1} parent=1 // pred_region
      %1205 = dma.done [#allocation4], 4096
    $region49: #{tpu_custom_call.1} parent=1 // pred_fallthru
      _
    %1206 = vsyncpa [#allocation3], 1
    %1207 = vsyncpa [#allocation6], 1
    %1208 = vsyncpa [#allocation9], 1
    %1209 = vsyncpa [#allocation4], 1

</llo_original>
